<compile_context>
chip_gen: v6e
topology: v6e:2x2x1
jax: 0.10.0
libtpu: 0.0.40
codegen_flags: <defaults>
</compile_context>

<pallas_src>
import jax
import jax.numpy as jnp
from jax.experimental import pallas as pl
from jax.experimental.pallas import tpu as pltpu


def _scale_kernel(scale_ref, x_ref, o_ref):
    # scale_ref: (1, 1) f32 scalar in SMEM; x_ref / o_ref: VMEM tiles.
    s = scale_ref[0, 0].astype(x_ref.dtype)          # keep VPU op in packed dtype
    o_ref[...] = (x_ref[...] * s).astype(o_ref.dtype)


def _round_up(v, m):
    return ((v + m - 1) // m) * m


def scale_forward(x, scale, *, block_bytes=2 * 1024 * 1024,
                  min_pallas_bytes=256 * 1024):
    """out = x * scale (learnable scalar). x: any shape; scale: shape (1,) or ()."""
    orig_shape = x.shape
    orig_dtype = x.dtype
    total = int(x.size)
    itemsize = jnp.dtype(orig_dtype).itemsize
    s32 = jnp.asarray(scale, dtype=jnp.float32).reshape(())

    # Fast path: small / awkwardly-sized inputs -> XLA fused elementwise is
    # strictly cheaper than kernel launch + grid-step overhead.
    if total == 0 or total * itemsize < min_pallas_bytes:
        return (x * s32).astype(orig_dtype)

    # Lane-dense view: widest lane count (multiple of 128) dividing the flat size.
    lanes = None
    for cand in (1024, 512, 256, 128):
        if total % cand == 0:
            lanes = cand
            break
    if lanes is None:
        return (x * s32).astype(orig_dtype)

    rows = total // lanes
    x2d = x.reshape(rows, lanes)          # free: contiguous reshape, no pad copy

    # Rows per block from a byte budget (~2 MiB per block).
    budget_rows = max(8, (block_bytes // (lanes * itemsize)) // 8 * 8)
    # Keep >= ~4 grid steps so v7x can shard the parallel axis over its 2 TCs.
    split_rows = _round_up(max(1, rows // 4), 8)
    tr = max(8, min(budget_rows, split_rows, _round_up(rows, 8)))
    grid = (pl.cdiv(rows, tr),)           # ragged last block is masked by Pallas

    scale_2d = s32.reshape(1, 1)

    out2d = pl.pallas_call(
        _scale_kernel,
        out_shape=jax.ShapeDtypeStruct((rows, lanes), orig_dtype),
        grid_spec=pl.GridSpec(
            grid=grid,
            in_specs=[
                pl.BlockSpec(memory_space=pltpu.SMEM),         # scalar scale
                pl.BlockSpec((tr, lanes), lambda i: (i, 0)),   # lane-dense tile
            ],
            out_specs=pl.BlockSpec((tr, lanes), lambda i: (i, 0)),
        ),
        input_output_aliases={1: 0},      # donate input buffer to the output
        compiler_params=pltpu.CompilerParams(
            dimension_semantics=("parallel",)),
    )(scale_2d, x2d)

    return out2d.reshape(orig_shape)


class ScalePallas:
    """JAX/Pallas equivalent of the PyTorch Scale module used in LocNet."""

    def __init__(self, init_value=1.0):
        self.scale = jnp.array([init_value], dtype=jnp.float32)

    def __call__(self, x):
        return scale_forward(x, self.scale)


if __name__ == "__main__":
    key = jax.random.PRNGKey(0)
    k1, k2 = jax.random.split(key)

    module = ScalePallas(init_value=1.0)
    # Non-trivial scale value to exercise the multiply deterministically.
    module.scale = jnp.array([1.5], dtype=jnp.float32)

    # (a) Reduced-channel feature-map sized tensor (batch=2, C=512, T=128):
    #     large enough (512 KiB) to take the Pallas lane-dense path.
    x_big = jax.random.normal(k1, (2, 512, 128), dtype=jnp.float32)
    ref_big = x_big * 1.5
    out_big = jax.block_until_ready(module(x_big))

    # (b) Per-level regression prediction (batch=2, T=32, 2): tiny -> XLA fast path.
    x_small = jax.random.normal(k2, (2, 32, 2), dtype=jnp.float32)
    ref_small = x_small * 1.5
    out_small = jax.block_until_ready(module(x_small))

    assert out_big.shape == x_big.shape and out_big.dtype == x_big.dtype
    assert out_small.shape == x_small.shape and out_small.dtype == x_small.dtype
    assert jnp.allclose(out_big, ref_big, atol=1e-6, rtol=1e-6)
    assert jnp.allclose(out_small, ref_small, atol=1e-6, rtol=1e-6)
    print("KERNEL_OK")
</pallas_src>

<mosaic_0001>
module attributes {stable_mosaic.version = 11 : i64} {
  func.func @_scale_kernel(%arg0: i32, %arg1: memref<1x1xf32, #tpu.memory_space<smem>>, %arg2: memref<32x1024xf32, #tpu.memory_space<vmem>>, %arg3: memref<32x1024xf32, #tpu.memory_space<vmem>>) attributes {dimension_semantics = [#tpu.dimension_semantics<parallel>], iteration_bounds = array<i64: 4>, scalar_prefetch = 0 : i64, scratch_operands = 0 : i64, tpu.core_type = #tpu.core_type<tc>, window_params = [{transform_indices = @transform_0, window_bounds = array<i64: 1, 1>}, {transform_indices = @transform_1, window_bounds = array<i64: 32, 1024>}, {transform_indices = @transform_2, window_bounds = array<i64: 32, 1024>}]} {
    %c0 = arith.constant 0 : index
    %c0_0 = arith.constant 0 : index
    %0 = memref.load %arg1[%c0, %c0_0] : memref<1x1xf32, #tpu.memory_space<smem>>
    %c0_1 = arith.constant 0 : index
    %c0_2 = arith.constant 0 : index
    %1 = vector.load %arg2[%c0_1, %c0_2] : memref<32x1024xf32, #tpu.memory_space<vmem>>, vector<32x1024xf32>
    %2 = vector.broadcast %0 : f32 to vector<32x1024xf32>
    %3 = arith.mulf %1, %2 : vector<32x1024xf32>
    %c0_3 = arith.constant 0 : index
    %c0_4 = arith.constant 0 : index
    %4 = vector.load %arg3[%c0_3, %c0_4] : memref<32x1024xf32, #tpu.memory_space<vmem>>, vector<32x1024xf32>
    tpu.vector_store %arg3[%c0_3, %c0_4], %3 {strides = array<i32>} : memref<32x1024xf32, #tpu.memory_space<vmem>>, vector<32x1024xf32>,
    return
  }
  func.func @transform_0(%arg0: i32) -> (i32, i32) {
    %c0_i32 = arith.constant 0 : i32
    %c0_i32_0 = arith.constant 0 : i32
    %c0_i32_1 = arith.constant 0 : i32
    return %c0_i32, %c0_i32_0 : i32, i32
  }
  func.func @transform_1(%arg0: i32) -> (i32, i32) {
    %c0_i32 = arith.constant 0 : i32
    %c0_i32_0 = arith.constant 0 : i32
    return %arg0, %c0_i32 : i32, i32
  }
  func.func @transform_2(%arg0: i32) -> (i32, i32) {
    %c0_i32 = arith.constant 0 : i32
    %c0_i32_0 = arith.constant 0 : i32
    return %arg0, %c0_i32 : i32, i32
  }
}

</mosaic_0001>

<llo_original>
// kernel: tpu_custom_call.1
$region0: #{tpu_custom_call.1}
  #allocation0 [shape = 'u32[]', space=smem, size = 0x4, offset = 0x4, fixed_abs, tag = 'smem constant byte address 0x4 - core index']
  #allocation1 [shape = 'u32[144,128]{1,0:T(1,128)}', space=vmem, size = 0x12000, scoped, tag = 'internal scratch']
  #allocation2 [shape = 'f32[1,1]{1,0:T(1,128)S(6)}', space=smem, size = 0x200, scoped, tag = 'scoped memory for tpu_custom_call.1']
  %s0 = inlined_call_operand.<no memory space> [shape: f32[1,1], index: 0, kind: input, shape index: {}]
  %s1 = inlined_call_operand.hbm [shape: f32[128,1024], index: 1, kind: input, shape index: {}, may-alias: {1,2}]
  %s2 = inlined_call_operand.hbm [shape: f32[128,1024], index: 2, kind: output, shape index: {}, may-alias: {1,2}]
  %s3 = sld [smem:[#allocation0]]
  $region45: #{tpu_custom_call.1} parent=0
    _
  %s5 = ssub.s32 1, %s3
  %s6 = scalar_select 0, %s5, %s3
  %7 = sst [smem:[#allocation2]] %s0
  $region1: #{tpu_custom_call.1} parent=0
    #allocation3 [shape = 'u8[262144]{0}', space=vmem, size = 0x40000, scoped, tag = 'input window, operand 1']
    #allocation4 [shape = 's32[2]{0}', space=sflag, size = 0x8, scoped, tag = 'scoped memory for tpu_custom_call.1']
    #allocation5 [shape = 's32[2]{0}', space=sflag, size = 0x8, scoped, tag = 'scoped memory for tpu_custom_call.1']
    #allocation6 [shape = 'u8[262144]{0}', space=vmem, size = 0x40000, scoped, tag = 'output window, operand 0']
    %8 = vsyncpa [#allocation4], 0
    %s9 = scalar_lea.sflag [#allocation4], 1
    %10 = vsyncpa %s9, 0
    %11 = vsyncpa [#allocation5], 0
    %s12 = scalar_lea.sflag [#allocation5], 1
    %13 = vsyncpa %s12, 0
    loop: start=0, step=1, limit=6
    $region2: #{tpu_custom_call.1} parent=1 // loop_pre_header
      _
    $region3: #{tpu_custom_call.1} parent=1 // loop_header
      %s15 = sphi 0, %s19
      %p16 = scmp.ge.s32.totalorder %s15, 6
      %s23 = sphi 0, %s23
      %s25 = sphi 0, %s23
      %s26 = sphi 0, %s25
      %s40 = sphi 0, %s26
      %s46 = sphi 0, %s48
      %s49 = sphi 0, %s46
      %s50 = sphi 0, %s49
      %s66 = sphi 0, %s50
      %s72 = sphi 0, %s74
      %s75 = sphi 0, %s72
      %s76 = sphi 0, %s75
      %s92 = sphi 0, %s76
    $region4: #{tpu_custom_call.1} parent=1 // loop_header_branch
      %18 = sbr.rel (%p16) target = $region8
    $region5: #{tpu_custom_call.1} parent=1 // loop_body
      %s20 = ssub.s32 %s15, 1
      %s21 = ssub.s32 %s15, 2
      %s22 = sadd.s32 %s15, 1
      %s24 = sadd.s32 %s23, 1
      %p27 = scmp.eq.s32.totalorder %s15, 3
      %p28 = scmp.ne.s32.totalorder %s23, %s25
      %p29 = scmp.eq.s32.totalorder %s15, 0
      %p30 = por %p28, %p29
      %p31 = scmp.ne.s32.totalorder %s23, %s25
      %p32 = scmp.eq.s32.totalorder %s20, 3
      %p33 = por %p31, %p32
      %p34 = scmp.ne.s32.totalorder %s25, %s26
      %p35 = scmp.eq.s32.totalorder %s20, 0
      %p36 = por %p34, %p35
      %p37 = scmp.ne.s32.totalorder %s25, %s26
      %p38 = scmp.eq.s32.totalorder %s21, 3
      %p39 = por %p37, %p38
      %p41 = scmp.ne.s32.totalorder %s26, %s40
      %p42 = scmp.eq.s32.totalorder %s21, 0
      %p43 = por %p41, %p42
      %s44 = ssub.s32 %s15, %s22
      %p45 = scmp.eq.s32.totalorder %s44, 0
      %s47 = sadd.s32 %s46, 1
      %s48 = scalar_select %p45, %s46, %s47
      %p51 = pneg %p45
      %p52 = scmp.eq.s32.totalorder %s15, 3
      %p53 = por %p51, %p52
      %p54 = scmp.ne.s32.totalorder %s46, %s49
      %p55 = scmp.eq.s32.totalorder %s15, 0
      %p56 = por %p54, %p55
      %p57 = scmp.ne.s32.totalorder %s46, %s49
      %p58 = scmp.eq.s32.totalorder %s20, 3
      %p59 = por %p57, %p58
      %p60 = scmp.ne.s32.totalorder %s49, %s50
      %p61 = scmp.eq.s32.totalorder %s20, 0
      %p62 = por %p60, %p61
      %p63 = scmp.ne.s32.totalorder %s49, %s50
      %p64 = scmp.eq.s32.totalorder %s21, 3
      %p65 = por %p63, %p64
      %p67 = scmp.ne.s32.totalorder %s50, %s66
      %p68 = scmp.eq.s32.totalorder %s21, 0
      %p69 = por %p67, %p68
      %s70 = ssub.s32 %s15, %s22
      %p71 = scmp.eq.s32.totalorder %s70, 0
      %s73 = sadd.s32 %s72, 1
      %s74 = scalar_select %p71, %s72, %s73
      %p77 = pneg %p71
      %p78 = scmp.eq.s32.totalorder %s15, 3
      %p79 = por %p77, %p78
      %p80 = scmp.ne.s32.totalorder %s72, %s75
      %p81 = scmp.eq.s32.totalorder %s15, 0
      %p82 = por %p80, %p81
      %p83 = scmp.ne.s32.totalorder %s72, %s75
      %p84 = scmp.eq.s32.totalorder %s20, 3
      %p85 = por %p83, %p84
      %p86 = scmp.ne.s32.totalorder %s75, %s76
      %p87 = scmp.eq.s32.totalorder %s20, 0
      %p88 = por %p86, %p87
      %p89 = scmp.ne.s32.totalorder %s75, %s76
      %p90 = scmp.eq.s32.totalorder %s21, 3
      %p91 = por %p89, %p90
      %p93 = scmp.ne.s32.totalorder %s76, %s92
      %p94 = scmp.eq.s32.totalorder %s21, 0
      %p95 = por %p93, %p94
      %p96 = scmp.le.s32.totalorder 1, %s15
      %p97 = scmp.lt.s32.totalorder %s15, 5
      %p98 = pnand %p96, %p97
      %p99 = pneg %p98
      // Predicated region
      $region9: #{tpu_custom_call.1} parent=5 // pred_check
        _
      $region10: #{tpu_custom_call.1} parent=5 // pred_check_branch
        %101 = sbr.rel (%p98) target = $region12
      $region11: #{tpu_custom_call.1} parent=5 // pred_region
        %s102 = ssub.s32 %s15, 1
        // Predicated region
        $region13: #{tpu_custom_call.1} parent=11 // pred_check
          %p103 = pneg %p36
        $region14: #{tpu_custom_call.1} parent=11 // pred_check_branch
          %105 = sbr.rel (%p103) target = $region16
        $region15: #{tpu_custom_call.1} parent=11 // pred_region
          _
        $region16: #{tpu_custom_call.1} parent=11 // pred_fallthru
          _
      $region12: #{tpu_custom_call.1} parent=5 // pred_fallthru
        _
      %p106 = scmp.lt.s32.totalorder %s15, 4
      // Predicated region
      $region17: #{tpu_custom_call.1} parent=5 // pred_check
        %p107 = pneg %p106
      $region18: #{tpu_custom_call.1} parent=5 // pred_check_branch
        %109 = sbr.rel (%p107) target = $region20
      $region19: #{tpu_custom_call.1} parent=5 // pred_region
        // Predicated region
        $region21: #{tpu_custom_call.1} parent=19 // pred_check
          %p110 = pneg %p56
        $region22: #{tpu_custom_call.1} parent=19 // pred_check_branch
          %112 = sbr.rel (%p110) target = $region24
        $region23: #{tpu_custom_call.1} parent=19 // pred_region
          %s113 = sand.u32 %s46, 1
          %s114 = scalar_lea.sflag [#allocation4], %s113
          %s115 = sand.u32 %s46, 1
          %s116 = smul.addr %s115, 256
          %s117 = scalar_lea.vmem [#allocation3], %s116
          %s118 = smul.u32 4, %s15
          %s120 = ssub.s32 4096, 4096
          %121 = vsyncadd %s114, %s120
          %s122 = smul.addr %s118, 8
          %s123 = smul.addr %s122, 128
          %s124 = scalar_lea.hbm %s1, %s123
          %s125 = sshll.u32 %s117, 4
          %s126 = int_to_ptr.vmem [resolvable:$true] %s125
          %131 = dma.hbm_to_vmem [thread:$0]  %s124, 4096, %s126, %s114, 1024, 1024, 64
        $region24: #{tpu_custom_call.1} parent=19 // pred_fallthru
          _
      $region20: #{tpu_custom_call.1} parent=5 // pred_fallthru
        _
      %p132 = scmp.le.s32.totalorder 1, %s15
      %p133 = scmp.lt.s32.totalorder %s15, 5
      %p134 = pnand %p132, %p133
      %p135 = pneg %p134
      // Predicated region
      $region25: #{tpu_custom_call.1} parent=5 // pred_check
        _
      $region26: #{tpu_custom_call.1} parent=5 // pred_check_branch
        %137 = sbr.rel (%p134) target = $region28
      $region27: #{tpu_custom_call.1} parent=5 // pred_region
        %s138 = ssub.s32 %s15, 1
        %s139 = sand.u32 %s49, 1
        %s140 = scalar_lea.sflag [#allocation4], %s139
        %s141 = sand.u32 %s49, 1
        %s142 = smul.addr %s141, 256
        %s143 = scalar_lea.vmem [#allocation3], %s142
        // Predicated region
        $region29: #{tpu_custom_call.1} parent=27 // pred_check
          %p144 = pneg %p62
        $region30: #{tpu_custom_call.1} parent=27 // pred_check_branch
          %146 = sbr.rel (%p144) target = $region32
        $region31: #{tpu_custom_call.1} parent=27 // pred_region
          %147 = dma.done %s140, 4096
        $region32: #{tpu_custom_call.1} parent=27 // pred_fallthru
          _
        %p148 = pneg %p36
        %p149 = pneg %p33
        %s150 = sand.u32 %s49, 1
        %s151 = scalar_lea.sflag [#allocation4], %s150
        %s152 = sand.u32 %s49, 1
        %s153 = smul.addr %s152, 256
        %s154 = scalar_lea.vmem [#allocation3], %s153
        %p155 = pneg %p62
        %p156 = pneg %p59
        %p157 = pneg %p88
        %p158 = pneg %p85
        %s159 = sand.u32 %s75, 1
        %s160 = scalar_lea.sflag [#allocation5], %s159
        %s161 = sand.u32 %s75, 1
        %s162 = smul.addr %s161, 256
        %s163 = scalar_lea.vmem [#allocation6], %s162
        %s164 = smul.u32 4, %s20
        %s165 = smul.u32 4, %s20
        %s166 = sld [smem:[#allocation2]]
        %v167 = vld [vmem:[%s143] sm:$0xff]
        %v168 = vld [vmem:[%s143 + $0x8] sm:$0xff]
        %v169 = vld [vmem:[%s143 + $0x10] sm:$0xff]
        %v170 = vld [vmem:[%s143 + $0x18] sm:$0xff]
        %v171 = vld [vmem:[%s143 + $0x20] sm:$0xff]
        %v172 = vld [vmem:[%s143 + $0x28] sm:$0xff]
        %v173 = vld [vmem:[%s143 + $0x30] sm:$0xff]
        %v174 = vld [vmem:[%s143 + $0x38] sm:$0xff]
        %v175 = vld [vmem:[%s143 + $0x40] sm:$0xff]
        %v176 = vld [vmem:[%s143 + $0x48] sm:$0xff]
        %v177 = vld [vmem:[%s143 + $0x50] sm:$0xff]
        %v178 = vld [vmem:[%s143 + $0x58] sm:$0xff]
        %v179 = vld [vmem:[%s143 + $0x60] sm:$0xff]
        %v180 = vld [vmem:[%s143 + $0x68] sm:$0xff]
        %v181 = vld [vmem:[%s143 + $0x70] sm:$0xff]
        %v182 = vld [vmem:[%s143 + $0x78] sm:$0xff]
        %v183 = vld [vmem:[%s143 + $0x80] sm:$0xff]
        %v184 = vld [vmem:[%s143 + $0x88] sm:$0xff]
        %v185 = vld [vmem:[%s143 + $0x90] sm:$0xff]
        %v186 = vld [vmem:[%s143 + $0x98] sm:$0xff]
        %v187 = vld [vmem:[%s143 + $0xa0] sm:$0xff]
        %v188 = vld [vmem:[%s143 + $0xa8] sm:$0xff]
        %v189 = vld [vmem:[%s143 + $0xb0] sm:$0xff]
        %v190 = vld [vmem:[%s143 + $0xb8] sm:$0xff]
        %v191 = vld [vmem:[%s143 + $0xc0] sm:$0xff]
        %v192 = vld [vmem:[%s143 + $0xc8] sm:$0xff]
        %v193 = vld [vmem:[%s143 + $0xd0] sm:$0xff]
        %v194 = vld [vmem:[%s143 + $0xd8] sm:$0xff]
        %v195 = vld [vmem:[%s143 + $0xe0] sm:$0xff]
        %v196 = vld [vmem:[%s143 + $0xe8] sm:$0xff]
        %v197 = vld [vmem:[%s143 + $0xf0] sm:$0xff]
        %v198 = vld [vmem:[%s143 + $0xf8] sm:$0xff]
        %v199 = vstv %s166
        %v200 = vmul.f32 %v167, %v199
        %v201 = vmul.f32 %v168, %v199
        %v202 = vmul.f32 %v169, %v199
        %v203 = vmul.f32 %v170, %v199
        %v204 = vmul.f32 %v171, %v199
        %v205 = vmul.f32 %v172, %v199
        %v206 = vmul.f32 %v173, %v199
        %v207 = vmul.f32 %v174, %v199
        %v208 = vmul.f32 %v175, %v199
        %v209 = vmul.f32 %v176, %v199
        %v210 = vmul.f32 %v177, %v199
        %v211 = vmul.f32 %v178, %v199
        %v212 = vmul.f32 %v179, %v199
        %v213 = vmul.f32 %v180, %v199
        %v214 = vmul.f32 %v181, %v199
        %v215 = vmul.f32 %v182, %v199
        %v216 = vmul.f32 %v183, %v199
        %v217 = vmul.f32 %v184, %v199
        %v218 = vmul.f32 %v185, %v199
        %v219 = vmul.f32 %v186, %v199
        %v220 = vmul.f32 %v187, %v199
        %v221 = vmul.f32 %v188, %v199
        %v222 = vmul.f32 %v189, %v199
        %v223 = vmul.f32 %v190, %v199
        %v224 = vmul.f32 %v191, %v199
        %v225 = vmul.f32 %v192, %v199
        %v226 = vmul.f32 %v193, %v199
        %v227 = vmul.f32 %v194, %v199
        %v228 = vmul.f32 %v195, %v199
        %v229 = vmul.f32 %v196, %v199
        %v230 = vmul.f32 %v197, %v199
        %v231 = vmul.f32 %v198, %v199
        %232 = vst [vmem:[%s163] sm:$0xff] %v200
        %233 = vst [vmem:[%s163 + $0x8] sm:$0xff] %v201
        %234 = vst [vmem:[%s163 + $0x10] sm:$0xff] %v202
        %235 = vst [vmem:[%s163 + $0x18] sm:$0xff] %v203
        %236 = vst [vmem:[%s163 + $0x20] sm:$0xff] %v204
        %237 = vst [vmem:[%s163 + $0x28] sm:$0xff] %v205
        %238 = vst [vmem:[%s163 + $0x30] sm:$0xff] %v206
        %239 = vst [vmem:[%s163 + $0x38] sm:$0xff] %v207
        %240 = vst [vmem:[%s163 + $0x40] sm:$0xff] %v208
        %241 = vst [vmem:[%s163 + $0x48] sm:$0xff] %v209
        %242 = vst [vmem:[%s163 + $0x50] sm:$0xff] %v210
        %243 = vst [vmem:[%s163 + $0x58] sm:$0xff] %v211
        %244 = vst [vmem:[%s163 + $0x60] sm:$0xff] %v212
        %245 = vst [vmem:[%s163 + $0x68] sm:$0xff] %v213
        %246 = vst [vmem:[%s163 + $0x70] sm:$0xff] %v214
        %247 = vst [vmem:[%s163 + $0x78] sm:$0xff] %v215
        %248 = vst [vmem:[%s163 + $0x80] sm:$0xff] %v216
        %249 = vst [vmem:[%s163 + $0x88] sm:$0xff] %v217
        %250 = vst [vmem:[%s163 + $0x90] sm:$0xff] %v218
        %251 = vst [vmem:[%s163 + $0x98] sm:$0xff] %v219
        %252 = vst [vmem:[%s163 + $0xa0] sm:$0xff] %v220
        %253 = vst [vmem:[%s163 + $0xa8] sm:$0xff] %v221
        %254 = vst [vmem:[%s163 + $0xb0] sm:$0xff] %v222
        %255 = vst [vmem:[%s163 + $0xb8] sm:$0xff] %v223
        %256 = vst [vmem:[%s163 + $0xc0] sm:$0xff] %v224
        %257 = vst [vmem:[%s163 + $0xc8] sm:$0xff] %v225
        %258 = vst [vmem:[%s163 + $0xd0] sm:$0xff] %v226
        %259 = vst [vmem:[%s163 + $0xd8] sm:$0xff] %v227
        %260 = vst [vmem:[%s163 + $0xe0] sm:$0xff] %v228
        %261 = vst [vmem:[%s163 + $0xe8] sm:$0xff] %v229
        %262 = vst [vmem:[%s163 + $0xf0] sm:$0xff] %v230
        %263 = vst [vmem:[%s163 + $0xf8] sm:$0xff] %v231
        %s264 = sand.u32 %s75, 1
        %s265 = scalar_lea.sflag [#allocation5], %s264
        %s266 = sand.u32 %s75, 1
        %s267 = smul.addr %s266, 256
        %s268 = scalar_lea.vmem [#allocation6], %s267
        // Predicated region
        $region33: #{tpu_custom_call.1} parent=27 // pred_check
          %p269 = pneg %p85
        $region34: #{tpu_custom_call.1} parent=27 // pred_check_branch
          %271 = sbr.rel (%p269) target = $region36
        $region35: #{tpu_custom_call.1} parent=27 // pred_region
          %s272 = smul.u32 4, %s20
          %s274 = ssub.s32 4096, 4096
          %275 = vsyncadd %s265, %s274
          %s276 = smul.addr %s272, 8
          %s277 = smul.addr %s276, 128
          %s278 = scalar_lea.hbm %s2, %s277
          %s279 = sshll.u32 %s268, 4
          %s280 = int_to_ptr.vmem [resolvable:$true] %s279
          %285 = dma.vmem_to_hbm [thread:$0]  %s280, 4096, %s278, %s265, 1024, 1024, 64
        $region36: #{tpu_custom_call.1} parent=27 // pred_fallthru
          _
      $region28: #{tpu_custom_call.1} parent=5 // pred_fallthru
        _
      %p286 = scmp.le.s32.totalorder 2, %s15
      // Predicated region
      $region37: #{tpu_custom_call.1} parent=5 // pred_check
        %p287 = pneg %p286
      $region38: #{tpu_custom_call.1} parent=5 // pred_check_branch
        %289 = sbr.rel (%p287) target = $region40
      $region39: #{tpu_custom_call.1} parent=5 // pred_region
        %s290 = ssub.s32 %s15, 2
        // Predicated region
        $region41: #{tpu_custom_call.1} parent=39 // pred_check
          %p291 = pneg %p91
        $region42: #{tpu_custom_call.1} parent=39 // pred_check_branch
          %293 = sbr.rel (%p291) target = $region44
        $region43: #{tpu_custom_call.1} parent=39 // pred_region
          %s294 = sand.u32 %s76, 1
          %s295 = scalar_lea.sflag [#allocation5], %s294
          %s296 = sand.u32 %s76, 1
          %s297 = smul.addr %s296, 256
          %s298 = scalar_lea.vmem [#allocation6], %s297
          %299 = dma.done %s295, 4096
        $region44: #{tpu_custom_call.1} parent=39 // pred_fallthru
          _
      $region40: #{tpu_custom_call.1} parent=5 // pred_fallthru
        _
    $region6: #{tpu_custom_call.1} parent=1 // loop_footer
      %s19 = sadd.s32 1, %s15
    $region7: #{tpu_custom_call.1} parent=1 // loop_footer_branch
      %14 = sbr.rel target = $region3
    $region8: #{tpu_custom_call.1} parent=1 // loop_exit
      _
    %300 = vsyncpa [#allocation4], 1
    %s301 = scalar_lea.sflag [#allocation4], 1
    %302 = vsyncpa %s301, 1
    %303 = vsyncpa [#allocation5], 1
    %s304 = scalar_lea.sflag [#allocation5], 1
    %305 = vsyncpa %s304, 1

</llo_original>
